<compile_context>
chip_gen: v7x
topology: tpu7x:2x2x1
jax: 0.10.0
libtpu: 0.0.40
codegen_flags: <defaults>
</compile_context>

<pallas_src>
import functools

import jax
import jax.numpy as jnp
from jax.experimental import pallas as pl
from jax.experimental.pallas import tpu as pltpu


def fvfm_kernel(x_ref, mt_ref, s_ref, o_ref):
    """One batch tile.

    x_ref : (TB, F*D)  lane-flattened features for this batch tile
    mt_ref: (F*D, F*D) operator, mt[(j,d2),(i,d1)] = [j>i] * W[i,j,d1] * (d1==d2)
    s_ref : (F*D, F)   0/1 segment-sum matrix, s[(j,d), i] = (i == j)
    o_ref : (TB, F)    output tile
    """
    x = x_ref[...]
    # y[b,(i,d)] = sum_j W[i,j,d] * x[b,j,d]   -- one lane-dense MXU matmul
    y = jnp.dot(x, mt_ref[...], preferred_element_type=jnp.float32)
    # z[b,(i,d)] = x[b,i,d] * y[b,(i,d)]       -- full-width VPU multiply
    z = x.astype(jnp.float32) * y
    # out[b,i]  = sum_d z[b,(i,d)]             -- segmented sum as a skinny matmul
    o_ref[...] = jnp.dot(
        z, s_ref[...], preferred_element_type=jnp.float32
    ).astype(o_ref.dtype)


def _pick_batch_tile(batch, block_b):
    """Batch tile: always a multiple of 128; >=2 grid steps when batch allows."""
    tb = max(128, (int(block_b) // 128) * 128)   # guard: 128-aligned even for odd block_b
    b128 = 128 * pl.cdiv(batch, 128)             # padded batch extent
    tb = min(tb, b128)
    if b128 >= 256:                              # v7x megacore: keep both TCs busy
        tb = min(tb, max(128, ((b128 // 2) // 128) * 128))
    return tb


@functools.partial(jax.jit, static_argnames=("block_b",))
def fvfm_transform(x, matrix, *, block_b=1024):
    """x: (B, F, D), matrix: (F, F, D) -> (B, F). Matches FvFMTransform.forward."""
    B, F, D = x.shape
    assert matrix.shape == (F, F, D)
    FD = F * D

    # ---- parameter-sized operators, built once (XLA-side, tiny) ----
    mask = jnp.triu(jnp.ones((F, F), jnp.float32), 1)[:, :, None]   # strict upper tri
    wm = mask * matrix.astype(jnp.float32)                          # (F, F, D)
    # m[(i,d1),(j,d2)] = wm[i,j,d1] * delta(d1,d2); kernel consumes m.T
    m = wm[:, :, :, None] * jnp.eye(D, dtype=jnp.float32)[None, None]
    m = jnp.transpose(m, (0, 2, 1, 3)).reshape(FD, FD)
    mt = m.T                                                        # (FD, FD)
    s = jnp.repeat(jnp.eye(F, dtype=jnp.float32), D, axis=0)        # (FD, F)

    # ---- lane-flatten (free reshape) + pad batch to a 128-aligned tile grid ----
    x2 = x.reshape(B, FD).astype(jnp.float32)
    TB = _pick_batch_tile(B, block_b)
    Bp = TB * pl.cdiv(B, TB)
    if Bp != B:
        x2 = jnp.pad(x2, ((0, Bp - B), (0, 0)))   # zero rows -> zero outputs, sliced off

    out = pl.pallas_call(
        fvfm_kernel,
        out_shape=jax.ShapeDtypeStruct((Bp, F), jnp.float32),
        grid=(Bp // TB,),
        in_specs=[
            # x: pipelined (double-buffered) lane-dense batch tiles.
            pl.BlockSpec((TB, FD), lambda b: (b, 0)),
            # operators: same block every step -> fetched once, resident in VMEM.
            pl.BlockSpec((FD, FD), lambda b: (0, 0)),
            pl.BlockSpec((FD, F), lambda b: (0, 0)),
        ],
        out_specs=pl.BlockSpec((TB, F), lambda b: (b, 0)),
        compiler_params=pltpu.CompilerParams(
            dimension_semantics=("parallel",),   # shard the batch grid across TCs on v7x
        ),
    )(x2, mt, s)

    return out[:B].astype(x.dtype)


if __name__ == "__main__":
    # small shapes: batch=2, featureNumb=8, dim=32
    B, F, D = 2, 8, 32
    key = jax.random.PRNGKey(0)
    kx, kw = jax.random.split(key)

    x = jax.random.normal(kx, (B, F, D), dtype=jnp.float32)
    # matches torch.nn.init.normal_(mean=0, std=0.001) on the (F, F, D) parameter
    matrix = 0.001 * jax.random.normal(kw, (F, F, D), dtype=jnp.float32)

    out = jax.block_until_ready(fvfm_transform(x, matrix))

    # pure-JAX reference of the PyTorch forward
    mask_ref = jnp.triu(jnp.ones((F, F), jnp.float32), 1)[:, :, None]  # (F, F, 1)
    ref = jnp.einsum('bid,ijd,bjd->bi', x, mask_ref * matrix, x)       # (B, F)

    assert out.shape == (B, F), out.shape
    # tolerance allows for MXU f32 multi-pass rounding (values are O(1e-2))
    assert jnp.allclose(out, ref, atol=1e-4, rtol=1e-3), float(jnp.max(jnp.abs(out - ref)))

    # multi-tile grid + ragged batch + non-128-multiple block_b (guarded internally)
    B2 = 260
    x2 = jax.random.normal(jax.random.PRNGKey(1), (B2, F, D), dtype=jnp.float32)
    out2 = jax.block_until_ready(fvfm_transform(x2, matrix, block_b=300))
    ref2 = jnp.einsum('bid,ijd,bjd->bi', x2, mask_ref * matrix, x2)
    assert out2.shape == (B2, F), out2.shape
    assert jnp.allclose(out2, ref2, atol=1e-4, rtol=1e-3), float(jnp.max(jnp.abs(out2 - ref2)))

    print("KERNEL_OK")
</pallas_src>

<mosaic_0001>
module attributes {stable_mosaic.version = 11 : i64} {
  func.func @fvfm_kernel(%arg0: i32, %arg1: memref<128x256xf32, #tpu.memory_space<vmem>>, %arg2: memref<256x256xf32, #tpu.memory_space<vmem>>, %arg3: memref<256x8xf32, #tpu.memory_space<vmem>>, %arg4: memref<128x8xf32, #tpu.memory_space<vmem>>) attributes {dimension_semantics = [#tpu.dimension_semantics<parallel>], iteration_bounds = array<i64: 1>, scalar_prefetch = 0 : i64, scratch_operands = 0 : i64, tpu.core_type = #tpu.core_type<tc>, window_params = [{transform_indices = @transform_0, window_bounds = array<i64: 128, 256>}, {pipeline_mode = #tpu.pipeline_mode<synchronous>, transform_indices = @transform_1, window_bounds = array<i64: 256, 256>}, {pipeline_mode = #tpu.pipeline_mode<synchronous>, transform_indices = @transform_2, window_bounds = array<i64: 256, 8>}, {transform_indices = @transform_3, window_bounds = array<i64: 128, 8>}]} {
    %c0 = arith.constant 0 : index
    %c0_0 = arith.constant 0 : index
    %0 = vector.load %arg1[%c0, %c0_0] : memref<128x256xf32, #tpu.memory_space<vmem>>, vector<128x256xf32>
    %c0_1 = arith.constant 0 : index
    %c0_2 = arith.constant 0 : index
    %1 = vector.load %arg2[%c0_1, %c0_2] : memref<256x256xf32, #tpu.memory_space<vmem>>, vector<256x256xf32>
    %cst = arith.constant dense<0.000000e+00> : vector<128x256xf32>
    %2 = tpu.matmul %0, %1, %cst {dimension_numbers = #tpu.dot_dimension_numbers<[1], [0], [0], [1], [0, 0, 1, 1], [], []>} : vector<128x256xf32>, vector<256x256xf32>, vector<128x256xf32> -> vector<128x256xf32>
    %3 = arith.mulf %0, %2 : vector<128x256xf32>
    %c0_3 = arith.constant 0 : index
    %c0_4 = arith.constant 0 : index
    %4 = vector.load %arg3[%c0_3, %c0_4] : memref<256x8xf32, #tpu.memory_space<vmem>>, vector<256x8xf32>
    %cst_5 = arith.constant dense<0.000000e+00> : vector<128x8xf32>
    %5 = tpu.matmul %3, %4, %cst_5 {dimension_numbers = #tpu.dot_dimension_numbers<[1], [0], [0], [1], [0, 0, 1, 1], [], []>} : vector<128x256xf32>, vector<256x8xf32>, vector<128x8xf32> -> vector<128x8xf32>
    %c0_6 = arith.constant 0 : index
    %c0_7 = arith.constant 0 : index
    %6 = vector.load %arg4[%c0_6, %c0_7] : memref<128x8xf32, #tpu.memory_space<vmem>>, vector<128x8xf32>
    tpu.vector_store %arg4[%c0_6, %c0_7], %5 {strides = array<i32>} : memref<128x8xf32, #tpu.memory_space<vmem>>, vector<128x8xf32>,
    return
  }
  func.func @transform_0(%arg0: i32) -> (i32, i32) {
    %c0_i32 = arith.constant 0 : i32
    %c0_i32_0 = arith.constant 0 : i32
    return %arg0, %c0_i32 : i32, i32
  }
  func.func @transform_1(%arg0: i32) -> (i32, i32) {
    %c0_i32 = arith.constant 0 : i32
    %c0_i32_0 = arith.constant 0 : i32
    %c0_i32_1 = arith.constant 0 : i32
    return %c0_i32, %c0_i32_0 : i32, i32
  }
  func.func @transform_2(%arg0: i32) -> (i32, i32) {
    %c0_i32 = arith.constant 0 : i32
    %c0_i32_0 = arith.constant 0 : i32
    %c0_i32_1 = arith.constant 0 : i32
    return %c0_i32, %c0_i32_0 : i32, i32
  }
  func.func @transform_3(%arg0: i32) -> (i32, i32) {
    %c0_i32 = arith.constant 0 : i32
    %c0_i32_0 = arith.constant 0 : i32
    return %arg0, %c0_i32 : i32, i32
  }
}

</mosaic_0001>

<llo_original>
// kernel: fvfm_transform.1
$region0: #{fvfm_transform.1}
  #allocation0 [shape = 'u32[]', space=smem, size = 0x4, offset = 0x4, fixed_abs, tag = 'smem constant byte address 0x4 - core index']
  #allocation1 [shape = 'u32[144,128]{1,0:T(1,128)}', space=vmem, size = 0x12000, scoped, tag = 'internal scratch']
  %s0 = inlined_call_operand.vmem [shape: f32[128,256], index: 0, kind: input, shape index: {}]
  %s1 = inlined_call_operand.vmem [shape: f32[256,256], index: 1, kind: input, shape index: {}]
  %s2 = inlined_call_operand.vmem [shape: f32[256,8], index: 2, kind: input, shape index: {}]
  %s3 = inlined_call_operand.vmem [shape: f32[128,8], index: 3, kind: output, shape index: {}]
  %s4 = sld [smem:[#allocation0]]
  $region22: #{fvfm_transform.1} parent=0
    _
  %s6 = ssub.s32 1, %s4
  %s7 = scalar_select 0, %s6, %s4
  // Predicated region
  $region2: #{fvfm_transform.1} parent=0 // pred_check
    _
  $region3: #{fvfm_transform.1} parent=0 // pred_check_branch
    %9 = sbr.rel (0) target = $region5
  $region4: #{fvfm_transform.1} parent=0 // pred_region
    _
  $region5: #{fvfm_transform.1} parent=0 // pred_fallthru
    _
  // Predicated region
  $region6: #{fvfm_transform.1} parent=0 // pred_check
    _
  $region7: #{fvfm_transform.1} parent=0 // pred_check_branch
    %11 = sbr.rel (0) target = $region9
  $region8: #{fvfm_transform.1} parent=0 // pred_region
    _
  $region9: #{fvfm_transform.1} parent=0 // pred_fallthru
    _
  // Predicated region
  $region10: #{fvfm_transform.1} parent=0 // pred_check
    _
  $region11: #{fvfm_transform.1} parent=0 // pred_check_branch
    %13 = sbr.rel (0) target = $region13
  $region12: #{fvfm_transform.1} parent=0 // pred_region
    _
  $region13: #{fvfm_transform.1} parent=0 // pred_fallthru
    _
  %v14 = vld [vmem:[%s0] sm:$0xff]
  %v15 = vld [vmem:[%s0 + $0x8] sm:$0xff]
  %v16 = vld [vmem:[%s0 + $0x10] sm:$0xff]
  %v17 = vld [vmem:[%s0 + $0x18] sm:$0xff]
  %v18 = vld [vmem:[%s0 + $0x20] sm:$0xff]
  %v19 = vld [vmem:[%s0 + $0x28] sm:$0xff]
  %v20 = vld [vmem:[%s0 + $0x30] sm:$0xff]
  %v21 = vld [vmem:[%s0 + $0x38] sm:$0xff]
  %v22 = vld [vmem:[%s0 + $0x40] sm:$0xff]
  %v23 = vld [vmem:[%s0 + $0x48] sm:$0xff]
  %v24 = vld [vmem:[%s0 + $0x50] sm:$0xff]
  %v25 = vld [vmem:[%s0 + $0x58] sm:$0xff]
  %v26 = vld [vmem:[%s0 + $0x60] sm:$0xff]
  %v27 = vld [vmem:[%s0 + $0x68] sm:$0xff]
  %v28 = vld [vmem:[%s0 + $0x70] sm:$0xff]
  %v29 = vld [vmem:[%s0 + $0x78] sm:$0xff]
  %v30 = vld [vmem:[%s0 + $0x80] sm:$0xff]
  %v31 = vld [vmem:[%s0 + $0x88] sm:$0xff]
  %v32 = vld [vmem:[%s0 + $0x90] sm:$0xff]
  %v33 = vld [vmem:[%s0 + $0x98] sm:$0xff]
  %v34 = vld [vmem:[%s0 + $0xa0] sm:$0xff]
  %v35 = vld [vmem:[%s0 + $0xa8] sm:$0xff]
  %v36 = vld [vmem:[%s0 + $0xb0] sm:$0xff]
  %v37 = vld [vmem:[%s0 + $0xb8] sm:$0xff]
  %v38 = vld [vmem:[%s0 + $0xc0] sm:$0xff]
  %v39 = vld [vmem:[%s0 + $0xc8] sm:$0xff]
  %v40 = vld [vmem:[%s0 + $0xd0] sm:$0xff]
  %v41 = vld [vmem:[%s0 + $0xd8] sm:$0xff]
  %v42 = vld [vmem:[%s0 + $0xe0] sm:$0xff]
  %v43 = vld [vmem:[%s0 + $0xe8] sm:$0xff]
  %v44 = vld [vmem:[%s0 + $0xf0] sm:$0xff]
  %v45 = vld [vmem:[%s0 + $0xf8] sm:$0xff]
  %v46 = vld [vmem:[%s1] sm:$0xff]
  %v47 = vld [vmem:[%s1 + $0x8] sm:$0xff]
  %v48 = vld [vmem:[%s1 + $0x10] sm:$0xff]
  %v49 = vld [vmem:[%s1 + $0x18] sm:$0xff]
  %v50 = vld [vmem:[%s1 + $0x20] sm:$0xff]
  %v51 = vld [vmem:[%s1 + $0x28] sm:$0xff]
  %v52 = vld [vmem:[%s1 + $0x30] sm:$0xff]
  %v53 = vld [vmem:[%s1 + $0x38] sm:$0xff]
  %v54 = vld [vmem:[%s1 + $0x40] sm:$0xff]
  %v55 = vld [vmem:[%s1 + $0x48] sm:$0xff]
  %v56 = vld [vmem:[%s1 + $0x50] sm:$0xff]
  %v57 = vld [vmem:[%s1 + $0x58] sm:$0xff]
  %v58 = vld [vmem:[%s1 + $0x60] sm:$0xff]
  %v59 = vld [vmem:[%s1 + $0x68] sm:$0xff]
  %v60 = vld [vmem:[%s1 + $0x70] sm:$0xff]
  %v61 = vld [vmem:[%s1 + $0x78] sm:$0xff]
  %v62 = vld [vmem:[%s1 + $0x80] sm:$0xff]
  %v63 = vld [vmem:[%s1 + $0x88] sm:$0xff]
  %v64 = vld [vmem:[%s1 + $0x90] sm:$0xff]
  %v65 = vld [vmem:[%s1 + $0x98] sm:$0xff]
  %v66 = vld [vmem:[%s1 + $0xa0] sm:$0xff]
  %v67 = vld [vmem:[%s1 + $0xa8] sm:$0xff]
  %v68 = vld [vmem:[%s1 + $0xb0] sm:$0xff]
  %v69 = vld [vmem:[%s1 + $0xb8] sm:$0xff]
  %v70 = vld [vmem:[%s1 + $0xc0] sm:$0xff]
  %v71 = vld [vmem:[%s1 + $0xc8] sm:$0xff]
  %v72 = vld [vmem:[%s1 + $0xd0] sm:$0xff]
  %v73 = vld [vmem:[%s1 + $0xd8] sm:$0xff]
  %v74 = vld [vmem:[%s1 + $0xe0] sm:$0xff]
  %v75 = vld [vmem:[%s1 + $0xe8] sm:$0xff]
  %v76 = vld [vmem:[%s1 + $0xf0] sm:$0xff]
  %v77 = vld [vmem:[%s1 + $0xf8] sm:$0xff]
  %v78 = vld [vmem:[%s1 + $0x100] sm:$0xff]
  %v79 = vld [vmem:[%s1 + $0x108] sm:$0xff]
  %v80 = vld [vmem:[%s1 + $0x110] sm:$0xff]
  %v81 = vld [vmem:[%s1 + $0x118] sm:$0xff]
  %v82 = vld [vmem:[%s1 + $0x120] sm:$0xff]
  %v83 = vld [vmem:[%s1 + $0x128] sm:$0xff]
  %v84 = vld [vmem:[%s1 + $0x130] sm:$0xff]
  %v85 = vld [vmem:[%s1 + $0x138] sm:$0xff]
  %v86 = vld [vmem:[%s1 + $0x140] sm:$0xff]
  %v87 = vld [vmem:[%s1 + $0x148] sm:$0xff]
  %v88 = vld [vmem:[%s1 + $0x150] sm:$0xff]
  %v89 = vld [vmem:[%s1 + $0x158] sm:$0xff]
  %v90 = vld [vmem:[%s1 + $0x160] sm:$0xff]
  %v91 = vld [vmem:[%s1 + $0x168] sm:$0xff]
  %v92 = vld [vmem:[%s1 + $0x170] sm:$0xff]
  %v93 = vld [vmem:[%s1 + $0x178] sm:$0xff]
  %v94 = vld [vmem:[%s1 + $0x180] sm:$0xff]
  %v95 = vld [vmem:[%s1 + $0x188] sm:$0xff]
  %v96 = vld [vmem:[%s1 + $0x190] sm:$0xff]
  %v97 = vld [vmem:[%s1 + $0x198] sm:$0xff]
  %v98 = vld [vmem:[%s1 + $0x1a0] sm:$0xff]
  %v99 = vld [vmem:[%s1 + $0x1a8] sm:$0xff]
  %v100 = vld [vmem:[%s1 + $0x1b0] sm:$0xff]
  %v101 = vld [vmem:[%s1 + $0x1b8] sm:$0xff]
  %v102 = vld [vmem:[%s1 + $0x1c0] sm:$0xff]
  %v103 = vld [vmem:[%s1 + $0x1c8] sm:$0xff]
  %v104 = vld [vmem:[%s1 + $0x1d0] sm:$0xff]
  %v105 = vld [vmem:[%s1 + $0x1d8] sm:$0xff]
  %v106 = vld [vmem:[%s1 + $0x1e0] sm:$0xff]
  %v107 = vld [vmem:[%s1 + $0x1e8] sm:$0xff]
  %v108 = vld [vmem:[%s1 + $0x1f0] sm:$0xff]
  %v109 = vld [vmem:[%s1 + $0x1f8] sm:$0xff]
  %110 = vmatprep.subr.mxu0 %v47
  %111 = vmatpush1.msra.mxu0 %v46
  %112 = vmatprep.subr.mxu0 %v49
  %113 = vmatpush1.msra.mxu0 %v48
  %114 = vmatprep.subr.mxu0 %v51
  %115 = vmatpush1.msra.mxu0 %v50
  %116 = vmatprep.subr.mxu0 %v53
  %117 = vmatpush1.msra.mxu0 %v52
  %118 = vmatprep.subr.mxu0 %v55
  %119 = vmatpush1.msra.mxu0 %v54
  %120 = vmatprep.subr.mxu0 %v57
  %121 = vmatpush1.msra.mxu0 %v56
  %122 = vmatprep.subr.mxu0 %v59
  %123 = vmatpush1.msra.mxu0 %v58
  %124 = vmatprep.subr.mxu0 %v61
  %125 = vmatpush1.msra.mxu0 %v60
  %126 = vmatprep.subr.mxu0 %v63
  %127 = vmatpush1.msra.mxu0 %v62
  %128 = vmatprep.subr.mxu0 %v65
  %129 = vmatpush1.msra.mxu0 %v64
  %130 = vmatprep.subr.mxu0 %v67
  %131 = vmatpush1.msra.mxu0 %v66
  %132 = vmatprep.subr.mxu0 %v69
  %133 = vmatpush1.msra.mxu0 %v68
  %134 = vmatprep.subr.mxu0 %v71
  %135 = vmatpush1.msra.mxu0 %v70
  %136 = vmatprep.subr.mxu0 %v73
  %137 = vmatpush1.msra.mxu0 %v72
  %138 = vmatprep.subr.mxu0 %v75
  %139 = vmatpush1.msra.mxu0 %v74
  %140 = vmatprep.subr.mxu0 %v77
  %141 = vmatpush1.msra.mxu0 %v76
  %142 = vmatprep.subr.mxu0 %v79
  %143 = vmatpush1.msra.mxu0 %v78
  %144 = vmatprep.subr.mxu0 %v81
  %145 = vmatpush1.msra.mxu0 %v80
  %146 = vmatprep.subr.mxu0 %v83
  %147 = vmatpush1.msra.mxu0 %v82
  %148 = vmatprep.subr.mxu0 %v85
  %149 = vmatpush1.msra.mxu0 %v84
  %150 = vmatprep.subr.mxu0 %v87
  %151 = vmatpush1.msra.mxu0 %v86
  %152 = vmatprep.subr.mxu0 %v89
  %153 = vmatpush1.msra.mxu0 %v88
  %154 = vmatprep.subr.mxu0 %v91
  %155 = vmatpush1.msra.mxu0 %v90
  %156 = vmatprep.subr.mxu0 %v93
  %157 = vmatpush1.msra.mxu0 %v92
  %158 = vmatprep.subr.mxu0 %v95
  %159 = vmatpush1.msra.mxu0 %v94
  %160 = vmatprep.subr.mxu0 %v97
  %161 = vmatpush1.msra.mxu0 %v96
  %162 = vmatprep.subr.mxu0 %v99
  %163 = vmatpush1.msra.mxu0 %v98
  %164 = vmatprep.subr.mxu0 %v101
  %165 = vmatpush1.msra.mxu0 %v100
  %166 = vmatprep.subr.mxu0 %v103
  %167 = vmatpush1.msra.mxu0 %v102
  %168 = vmatprep.subr.mxu0 %v105
  %169 = vmatpush1.msra.mxu0 %v104
  %170 = vmatprep.subr.mxu0 %v107
  %171 = vmatpush1.msra.mxu0 %v106
  %172 = vmatprep.subr.mxu0 %v109
  %173 = vmatpush1.msra.mxu0 %v108
  %174 = vmatprep.mubr.f32.mxu0 %v15
  %175 = vmatmul.mubr.f32.gmra.mrb[0].mxu0 %v14
  %v176 = vpop.f32.mrb[0].mxu0
  %v177 = vadd.f32 0.0, %v176
  %v178 = vpop.f32.mrb[0].mxu0
  %v179 = vadd.f32 0.0, %v178
  %180 = vmatprep.mubr.f32.mxu0 %v17
  %181 = vmatmul.mubr.f32.gmra.mrb[0].mxu0 %v16
  %v182 = vpop.f32.mrb[0].mxu0
  %v183 = vadd.f32 0.0, %v182
  %v184 = vpop.f32.mrb[0].mxu0
  %v185 = vadd.f32 0.0, %v184
  %186 = vmatprep.mubr.f32.mxu0 %v19
  %187 = vmatmul.mubr.f32.gmra.mrb[0].mxu0 %v18
  %v188 = vpop.f32.mrb[0].mxu0
  %v189 = vadd.f32 0.0, %v188
  %v190 = vpop.f32.mrb[0].mxu0
  %v191 = vadd.f32 0.0, %v190
  %192 = vmatprep.mubr.f32.mxu0 %v21
  %193 = vmatmul.mubr.f32.gmra.mrb[0].mxu0 %v20
  %v194 = vpop.f32.mrb[0].mxu0
  %v195 = vadd.f32 0.0, %v194
  %v196 = vpop.f32.mrb[0].mxu0
  %v197 = vadd.f32 0.0, %v196
  %198 = vmatprep.mubr.f32.mxu0 %v23
  %199 = vmatmul.mubr.f32.gmra.mrb[0].mxu0 %v22
  %v200 = vpop.f32.mrb[0].mxu0
  %v201 = vadd.f32 0.0, %v200
  %v202 = vpop.f32.mrb[0].mxu0
  %v203 = vadd.f32 0.0, %v202
  %204 = vmatprep.mubr.f32.mxu0 %v25
  %205 = vmatmul.mubr.f32.gmra.mrb[0].mxu0 %v24
  %v206 = vpop.f32.mrb[0].mxu0
  %v207 = vadd.f32 0.0, %v206
  %v208 = vpop.f32.mrb[0].mxu0
  %v209 = vadd.f32 0.0, %v208
  %210 = vmatprep.mubr.f32.mxu0 %v27
  %211 = vmatmul.mubr.f32.gmra.mrb[0].mxu0 %v26
  %v212 = vpop.f32.mrb[0].mxu0
  %v213 = vadd.f32 0.0, %v212
  %v214 = vpop.f32.mrb[0].mxu0
  %v215 = vadd.f32 0.0, %v214
  %216 = vmatprep.mubr.f32.mxu0 %v29
  %217 = vmatmul.mubr.f32.gmra.mrb[0].mxu0 %v28
  %v218 = vpop.f32.mrb[0].mxu0
  %v219 = vadd.f32 0.0, %v218
  %v220 = vpop.f32.mrb[0].mxu0
  %v221 = vadd.f32 0.0, %v220
  %222 = vmatprep.mubr.f32.mxu0 %v31
  %223 = vmatmul.mubr.f32.gmra.mrb[0].mxu0 %v30
  %v224 = vpop.f32.mrb[0].mxu0
  %v225 = vadd.f32 0.0, %v224
  %v226 = vpop.f32.mrb[0].mxu0
  %v227 = vadd.f32 0.0, %v226
  %228 = vmatprep.mubr.f32.mxu0 %v33
  %229 = vmatmul.mubr.f32.gmra.mrb[0].mxu0 %v32
  %v230 = vpop.f32.mrb[0].mxu0
  %v231 = vadd.f32 0.0, %v230
  %v232 = vpop.f32.mrb[0].mxu0
  %v233 = vadd.f32 0.0, %v232
  %234 = vmatprep.mubr.f32.mxu0 %v35
  %235 = vmatmul.mubr.f32.gmra.mrb[0].mxu0 %v34
  %v236 = vpop.f32.mrb[0].mxu0
  %v237 = vadd.f32 0.0, %v236
  %v238 = vpop.f32.mrb[0].mxu0
  %v239 = vadd.f32 0.0, %v238
  %240 = vmatprep.mubr.f32.mxu0 %v37
  %241 = vmatmul.mubr.f32.gmra.mrb[0].mxu0 %v36
  %v242 = vpop.f32.mrb[0].mxu0
  %v243 = vadd.f32 0.0, %v242
  %v244 = vpop.f32.mrb[0].mxu0
  %v245 = vadd.f32 0.0, %v244
  %246 = vmatprep.mubr.f32.mxu0 %v39
  %247 = vmatmul.mubr.f32.gmra.mrb[0].mxu0 %v38
  %v248 = vpop.f32.mrb[0].mxu0
  %v249 = vadd.f32 0.0, %v248
  %v250 = vpop.f32.mrb[0].mxu0
  %v251 = vadd.f32 0.0, %v250
  %252 = vmatprep.mubr.f32.mxu0 %v41
  %253 = vmatmul.mubr.f32.gmra.mrb[0].mxu0 %v40
  %v254 = vpop.f32.mrb[0].mxu0
  %v255 = vadd.f32 0.0, %v254
  %v256 = vpop.f32.mrb[0].mxu0
  %v257 = vadd.f32 0.0, %v256
  %258 = vmatprep.mubr.f32.mxu0 %v43
  %259 = vmatmul.mubr.f32.gmra.mrb[0].mxu0 %v42
  %v260 = vpop.f32.mrb[0].mxu0
  %v261 = vadd.f32 0.0, %v260
  %v262 = vpop.f32.mrb[0].mxu0
  %v263 = vadd.f32 0.0, %v262
  %264 = vmatprep.mubr.f32.mxu0 %v45
  %265 = vmatmul.mubr.f32.gmra.mrb[0].mxu0 %v44
  %v266 = vpop.f32.mrb[0].mxu0
  %v267 = vadd.f32 0.0, %v266
  %v268 = vpop.f32.mrb[0].mxu0
  %v269 = vadd.f32 0.0, %v268
  %270 = vdwg.mxu0
  %v271 = vmul.f32 %v14, %v177
  %v272 = vmul.f32 %v15, %v179
  %v273 = vmul.f32 %v16, %v183
  %v274 = vmul.f32 %v17, %v185
  %v275 = vmul.f32 %v18, %v189
  %v276 = vmul.f32 %v19, %v191
  %v277 = vmul.f32 %v20, %v195
  %v278 = vmul.f32 %v21, %v197
  %v279 = vmul.f32 %v22, %v201
  %v280 = vmul.f32 %v23, %v203
  %v281 = vmul.f32 %v24, %v207
  %v282 = vmul.f32 %v25, %v209
  %v283 = vmul.f32 %v26, %v213
  %v284 = vmul.f32 %v27, %v215
  %v285 = vmul.f32 %v28, %v219
  %v286 = vmul.f32 %v29, %v221
  %v287 = vmul.f32 %v30, %v225
  %v288 = vmul.f32 %v31, %v227
  %v289 = vmul.f32 %v32, %v231
  %v290 = vmul.f32 %v33, %v233
  %v291 = vmul.f32 %v34, %v237
  %v292 = vmul.f32 %v35, %v239
  %v293 = vmul.f32 %v36, %v243
  %v294 = vmul.f32 %v37, %v245
  %v295 = vmul.f32 %v38, %v249
  %v296 = vmul.f32 %v39, %v251
  %v297 = vmul.f32 %v40, %v255
  %v298 = vmul.f32 %v41, %v257
  %v299 = vmul.f32 %v42, %v261
  %v300 = vmul.f32 %v43, %v263
  %v301 = vmul.f32 %v44, %v267
  %v302 = vmul.f32 %v45, %v269
  %v303 = vld [vmem:[%s2] sm:$0xff]
  %v304 = vld [vmem:[%s2 + $0x8] sm:$0xff]
  %v305 = vld [vmem:[%s2 + $0x10] sm:$0xff]
  %v306 = vld [vmem:[%s2 + $0x18] sm:$0xff]
  %v307 = vld [vmem:[%s2 + $0x20] sm:$0xff]
  %v308 = vld [vmem:[%s2 + $0x28] sm:$0xff]
  %v309 = vld [vmem:[%s2 + $0x30] sm:$0xff]
  %v310 = vld [vmem:[%s2 + $0x38] sm:$0xff]
  %v311 = vld [vmem:[%s2 + $0x40] sm:$0xff]
  %v312 = vld [vmem:[%s2 + $0x48] sm:$0xff]
  %v313 = vld [vmem:[%s2 + $0x50] sm:$0xff]
  %v314 = vld [vmem:[%s2 + $0x58] sm:$0xff]
  %v315 = vld [vmem:[%s2 + $0x60] sm:$0xff]
  %v316 = vld [vmem:[%s2 + $0x68] sm:$0xff]
  %v317 = vld [vmem:[%s2 + $0x70] sm:$0xff]
  %v318 = vld [vmem:[%s2 + $0x78] sm:$0xff]
  %v319 = vld [vmem:[%s2 + $0x80] sm:$0xff]
  %v320 = vld [vmem:[%s2 + $0x88] sm:$0xff]
  %v321 = vld [vmem:[%s2 + $0x90] sm:$0xff]
  %v322 = vld [vmem:[%s2 + $0x98] sm:$0xff]
  %v323 = vld [vmem:[%s2 + $0xa0] sm:$0xff]
  %v324 = vld [vmem:[%s2 + $0xa8] sm:$0xff]
  %v325 = vld [vmem:[%s2 + $0xb0] sm:$0xff]
  %v326 = vld [vmem:[%s2 + $0xb8] sm:$0xff]
  %v327 = vld [vmem:[%s2 + $0xc0] sm:$0xff]
  %v328 = vld [vmem:[%s2 + $0xc8] sm:$0xff]
  %v329 = vld [vmem:[%s2 + $0xd0] sm:$0xff]
  %v330 = vld [vmem:[%s2 + $0xd8] sm:$0xff]
  %v331 = vld [vmem:[%s2 + $0xe0] sm:$0xff]
  %v332 = vld [vmem:[%s2 + $0xe8] sm:$0xff]
  %v333 = vld [vmem:[%s2 + $0xf0] sm:$0xff]
  %v334 = vld [vmem:[%s2 + $0xf8] sm:$0xff]
  %335 = vmatprep.subr.mxu0 0.0
  %336 = vmatpush1.msra.mxu0 %v303
  %337 = vmatprep.subr.mxu0 0.0
  %338 = vmatpush1.msra.mxu0 %v304
  %339 = vmatprep.subr.mxu0 0.0
  %340 = vmatpush1.msra.mxu0 %v305
  %341 = vmatprep.subr.mxu0 0.0
  %342 = vmatpush1.msra.mxu0 %v306
  %343 = vmatprep.subr.mxu0 0.0
  %344 = vmatpush1.msra.mxu0 %v307
  %345 = vmatprep.subr.mxu0 0.0
  %346 = vmatpush1.msra.mxu0 %v308
  %347 = vmatprep.subr.mxu0 0.0
  %348 = vmatpush1.msra.mxu0 %v309
  %349 = vmatprep.subr.mxu0 0.0
  %350 = vmatpush1.msra.mxu0 %v310
  %351 = vmatprep.subr.mxu0 0.0
  %352 = vmatpush1.msra.mxu0 %v311
  %353 = vmatprep.subr.mxu0 0.0
  %354 = vmatpush1.msra.mxu0 %v312
  %355 = vmatprep.subr.mxu0 0.0
  %356 = vmatpush1.msra.mxu0 %v313
  %357 = vmatprep.subr.mxu0 0.0
  %358 = vmatpush1.msra.mxu0 %v314
  %359 = vmatprep.subr.mxu0 0.0
  %360 = vmatpush1.msra.mxu0 %v315
  %361 = vmatprep.subr.mxu0 0.0
  %362 = vmatpush1.msra.mxu0 %v316
  %363 = vmatprep.subr.mxu0 0.0
  %364 = vmatpush1.msra.mxu0 %v317
  %365 = vmatprep.subr.mxu0 0.0
  %366 = vmatpush1.msra.mxu0 %v318
  %367 = vmatprep.subr.mxu0 0.0
  %368 = vmatpush1.msra.mxu0 %v319
  %369 = vmatprep.subr.mxu0 0.0
  %370 = vmatpush1.msra.mxu0 %v320
  %371 = vmatprep.subr.mxu0 0.0
  %372 = vmatpush1.msra.mxu0 %v321
  %373 = vmatprep.subr.mxu0 0.0
  %374 = vmatpush1.msra.mxu0 %v322
  %375 = vmatprep.subr.mxu0 0.0
  %376 = vmatpush1.msra.mxu0 %v323
  %377 = vmatprep.subr.mxu0 0.0
  %378 = vmatpush1.msra.mxu0 %v324
  %379 = vmatprep.subr.mxu0 0.0
  %380 = vmatpush1.msra.mxu0 %v325
  %381 = vmatprep.subr.mxu0 0.0
  %382 = vmatpush1.msra.mxu0 %v326
  %383 = vmatprep.subr.mxu0 0.0
  %384 = vmatpush1.msra.mxu0 %v327
  %385 = vmatprep.subr.mxu0 0.0
  %386 = vmatpush1.msra.mxu0 %v328
  %387 = vmatprep.subr.mxu0 0.0
  %388 = vmatpush1.msra.mxu0 %v329
  %389 = vmatprep.subr.mxu0 0.0
  %390 = vmatpush1.msra.mxu0 %v330
  %391 = vmatprep.subr.mxu0 0.0
  %392 = vmatpush1.msra.mxu0 %v331
  %393 = vmatprep.subr.mxu0 0.0
  %394 = vmatpush1.msra.mxu0 %v332
  %395 = vmatprep.subr.mxu0 0.0
  %396 = vmatpush1.msra.mxu0 %v333
  %397 = vmatprep.subr.mxu0 0.0
  %398 = vmatpush1.msra.mxu0 %v334
  %399 = vmatprep.mubr.f32.mxu0 %v272
  %400 = vmatmul.mubr.f32.gmra.mrb[0].mxu0 %v271
  %v401 = vpop.f32.mrb[0].mxu0
  %v402 = vadd.f32 0.0, %v401
  %v403 = vpop.f32.mrb[0].mxu0
  %404 = vmatprep.mubr.f32.mxu0 %v274
  %405 = vmatmul.mubr.f32.gmra.mrb[0].mxu0 %v273
  %v406 = vpop.f32.mrb[0].mxu0
  %v407 = vadd.f32 0.0, %v406
  %v408 = vpop.f32.mrb[0].mxu0
  %409 = vmatprep.mubr.f32.mxu0 %v276
  %410 = vmatmul.mubr.f32.gmra.mrb[0].mxu0 %v275
  %v411 = vpop.f32.mrb[0].mxu0
  %v412 = vadd.f32 0.0, %v411
  %v413 = vpop.f32.mrb[0].mxu0
  %414 = vmatprep.mubr.f32.mxu0 %v278
  %415 = vmatmul.mubr.f32.gmra.mrb[0].mxu0 %v277
  %v416 = vpop.f32.mrb[0].mxu0
  %v417 = vadd.f32 0.0, %v416
  %v418 = vpop.f32.mrb[0].mxu0
  %419 = vmatprep.mubr.f32.mxu0 %v280
  %420 = vmatmul.mubr.f32.gmra.mrb[0].mxu0 %v279
  %v421 = vpop.f32.mrb[0].mxu0
  %v422 = vadd.f32 0.0, %v421
  %v423 = vpop.f32.mrb[0].mxu0
  %424 = vmatprep.mubr.f32.mxu0 %v282
  %425 = vmatmul.mubr.f32.gmra.mrb[0].mxu0 %v281
  %v426 = vpop.f32.mrb[0].mxu0
  %v427 = vadd.f32 0.0, %v426
  %v428 = vpop.f32.mrb[0].mxu0
  %429 = vmatprep.mubr.f32.mxu0 %v284
  %430 = vmatmul.mubr.f32.gmra.mrb[0].mxu0 %v283
  %v431 = vpop.f32.mrb[0].mxu0
  %v432 = vadd.f32 0.0, %v431
  %v433 = vpop.f32.mrb[0].mxu0
  %434 = vmatprep.mubr.f32.mxu0 %v286
  %435 = vmatmul.mubr.f32.gmra.mrb[0].mxu0 %v285
  %v436 = vpop.f32.mrb[0].mxu0
  %v437 = vadd.f32 0.0, %v436
  %v438 = vpop.f32.mrb[0].mxu0
  %439 = vmatprep.mubr.f32.mxu0 %v288
  %440 = vmatmul.mubr.f32.gmra.mrb[0].mxu0 %v287
  %v441 = vpop.f32.mrb[0].mxu0
  %v442 = vadd.f32 0.0, %v441
  %v443 = vpop.f32.mrb[0].mxu0
  %444 = vmatprep.mubr.f32.mxu0 %v290
  %445 = vmatmul.mubr.f32.gmra.mrb[0].mxu0 %v289
  %v446 = vpop.f32.mrb[0].mxu0
  %v447 = vadd.f32 0.0, %v446
  %v448 = vpop.f32.mrb[0].mxu0
  %449 = vmatprep.mubr.f32.mxu0 %v292
  %450 = vmatmul.mubr.f32.gmra.mrb[0].mxu0 %v291
  %v451 = vpop.f32.mrb[0].mxu0
  %v452 = vadd.f32 0.0, %v451
  %v453 = vpop.f32.mrb[0].mxu0
  %454 = vmatprep.mubr.f32.mxu0 %v294
  %455 = vmatmul.mubr.f32.gmra.mrb[0].mxu0 %v293
  %v456 = vpop.f32.mrb[0].mxu0
  %v457 = vadd.f32 0.0, %v456
  %v458 = vpop.f32.mrb[0].mxu0
  %459 = vmatprep.mubr.f32.mxu0 %v296
  %460 = vmatmul.mubr.f32.gmra.mrb[0].mxu0 %v295
  %v461 = vpop.f32.mrb[0].mxu0
  %v462 = vadd.f32 0.0, %v461
  %v463 = vpop.f32.mrb[0].mxu0
  %464 = vmatprep.mubr.f32.mxu0 %v298
  %465 = vmatmul.mubr.f32.gmra.mrb[0].mxu0 %v297
  %v466 = vpop.f32.mrb[0].mxu0
  %v467 = vadd.f32 0.0, %v466
  %v468 = vpop.f32.mrb[0].mxu0
  %469 = vmatprep.mubr.f32.mxu0 %v300
  %470 = vmatmul.mubr.f32.gmra.mrb[0].mxu0 %v299
  %v471 = vpop.f32.mrb[0].mxu0
  %v472 = vadd.f32 0.0, %v471
  %v473 = vpop.f32.mrb[0].mxu0
  %474 = vmatprep.mubr.f32.mxu0 %v302
  %475 = vmatmul.mubr.f32.gmra.mrb[0].mxu0 %v301
  %v476 = vpop.f32.mrb[0].mxu0
  %v477 = vadd.f32 0.0, %v476
  %v478 = vpop.f32.mrb[0].mxu0
  %479 = vdwg.mxu0
  %vm480 = vcmask 64512
  %481 = vst.msk [vmem:[%s3] sm:$0xff] %vm480, %v402
  %482 = vst.msk [vmem:[%s3 + $0x8] sm:$0xff] %vm480, %v407
  %483 = vst.msk [vmem:[%s3 + $0x10] sm:$0xff] %vm480, %v412
  %484 = vst.msk [vmem:[%s3 + $0x18] sm:$0xff] %vm480, %v417
  %485 = vst.msk [vmem:[%s3 + $0x20] sm:$0xff] %vm480, %v422
  %486 = vst.msk [vmem:[%s3 + $0x28] sm:$0xff] %vm480, %v427
  %487 = vst.msk [vmem:[%s3 + $0x30] sm:$0xff] %vm480, %v432
  %488 = vst.msk [vmem:[%s3 + $0x38] sm:$0xff] %vm480, %v437
  %489 = vst.msk [vmem:[%s3 + $0x40] sm:$0xff] %vm480, %v442
  %490 = vst.msk [vmem:[%s3 + $0x48] sm:$0xff] %vm480, %v447
  %491 = vst.msk [vmem:[%s3 + $0x50] sm:$0xff] %vm480, %v452
  %492 = vst.msk [vmem:[%s3 + $0x58] sm:$0xff] %vm480, %v457
  %493 = vst.msk [vmem:[%s3 + $0x60] sm:$0xff] %vm480, %v462
  %494 = vst.msk [vmem:[%s3 + $0x68] sm:$0xff] %vm480, %v467
  %495 = vst.msk [vmem:[%s3 + $0x70] sm:$0xff] %vm480, %v472
  %496 = vst.msk [vmem:[%s3 + $0x78] sm:$0xff] %vm480, %v477
  // Predicated region
  $region14: #{fvfm_transform.1} parent=0 // pred_check
    _
  $region15: #{fvfm_transform.1} parent=0 // pred_check_branch
    %498 = sbr.rel (0) target = $region17
  $region16: #{fvfm_transform.1} parent=0 // pred_region
    _
  $region17: #{fvfm_transform.1} parent=0 // pred_fallthru
    _
  // Predicated region
  $region18: #{fvfm_transform.1} parent=0 // pred_check
    _
  $region19: #{fvfm_transform.1} parent=0 // pred_check_branch
    %500 = sbr.rel (0) target = $region21
  $region20: #{fvfm_transform.1} parent=0 // pred_region
    _
  $region21: #{fvfm_transform.1} parent=0 // pred_fallthru
    _

</llo_original>
